<compile_context>
chip_gen: v6e
topology: v6e:2x2x1
jax: 0.10.0
libtpu: 0.0.40
codegen_flags: <defaults>
</compile_context>

<pallas_src>
import functools

import jax
import jax.numpy as jnp
from jax.experimental import pallas as pl
from jax.experimental.pallas import tpu as pltpu

_LANE = 128      # lane quantum (last / fast dim)
_SUBLANE = 8     # f32 sublane quantum (second-to-last dim)


def _round_up(x, m):
    return ((x + m - 1) // m) * m


def _mlp_kernel(n_action, xT_ref, w1_ref, b1_ref, w2_ref, b2_ref, w3_ref,
                b3_ref, o_ref):
    # One batch tile per grid step, transposed [features, batch] layout.
    # Weights/biases are VMEM-resident for the whole grid (constant index_maps).
    x = xT_ref[...]                                        # (k_pad, tile_b) f32

    h1 = jnp.dot(w1_ref[...], x.astype(w1_ref.dtype),
                 preferred_element_type=jnp.float32) + b1_ref[...]
    h1 = jnp.maximum(h1, 0.0)                              # (256, tile_b) f32

    h2 = jnp.dot(w2_ref[...], h1.astype(w2_ref.dtype),
                 preferred_element_type=jnp.float32) + b2_ref[...]
    h2 = jnp.maximum(h2, 0.0)                              # (256, tile_b) f32

    logits = jnp.dot(w3_ref[...], h2.astype(w3_ref.dtype),
                     preferred_element_type=jnp.float32) + b3_ref[...]
    # logits: (n_action, tile_b) f32

    if n_action == 2:
        # softmax over 2 classes == sigmoid of the logit difference (a plain
        # row subtract in this layout): no max/sum reductions, exact division.
        d = logits[0:1, :] - logits[1:2, :]                # (1, tile_b)
        p0 = 1.0 / (1.0 + jnp.exp(-d))
        o_ref[0:1, :] = p0.astype(o_ref.dtype)
        o_ref[1:2, :] = (1.0 - p0).astype(o_ref.dtype)
    else:
        # General numerically-stable softmax over the tiny action axis.
        m = jnp.max(logits, axis=0, keepdims=True)
        e = jnp.exp(logits - m)
        o_ref[...] = (e / jnp.sum(e, axis=0, keepdims=True)).astype(o_ref.dtype)


def cartpole_net(state, params, *, tile_b=2048, param_dtype=jnp.bfloat16):
    """Forward pass of CartpoleNet (softmax=True).

    state:  (B, n_state) f32; returns (B, n_action) f32 probabilities.
    params: PyTorch-native layouts: w1 (256, n_state), b1 (256,),
            w2 (256, 256), b2 (256,), w3 (n_action, 256), b3 (n_action,).
    tile_b: cap on the batch-tile width (lane axis, multiple of 128).
            2048 keeps f32 intermediates well under v5e's 16 MiB scoped VMEM.
    param_dtype: dtype for the matmul weights (bf16 default -- bf16-native MXU
            on v6e/v7x, supported on v5e; do NOT use int8 on v7x). Pass None
            for exact f32 weights. Bias / ReLU / softmax math and MXU
            accumulation are always f32.
    """
    w1, b1 = params["w1"], params["b1"]
    w2, b2 = params["w2"], params["b2"]
    w3, b3 = params["w3"], params["b3"]

    B, n_state = state.shape
    hidden = w1.shape[0]
    n_action = w3.shape[0]

    # Transposed [features, batch] layout: batch is the lane-dense last dim of
    # every streamed/stored block; feature dims sit on sublanes.
    xT = state.astype(jnp.float32).T                       # (n_state, B)

    # Pad the tiny feature dim 4 -> 8 (f32 sublane quantum). Matching zero
    # columns in w1 keep the math a no-op. K stays 8 -- not inflated to 128.
    k_pad = _round_up(max(n_state, _SUBLANE), _SUBLANE)
    if k_pad != n_state:
        xT = jnp.pad(xT, ((0, k_pad - n_state), (0, 0)))
        w1 = jnp.pad(w1, ((0, 0), (0, k_pad - n_state)))

    if param_dtype is not None:
        w1, w2, w3 = (w.astype(param_dtype) for w in (w1, w2, w3))

    b1 = b1.reshape(hidden, 1).astype(jnp.float32)
    b2 = b2.reshape(hidden, 1).astype(jnp.float32)
    b3 = b3.reshape(n_action, 1).astype(jnp.float32)

    # Batch tiling (lane axis -> multiples of 128). Prefer few, fat tiles to
    # amortize the ~0.35 us/grid-step overhead, but keep >= 2 grid steps when
    # there is enough work so v7x's two TensorCores both get a share.
    tile_cap = max(_LANE, _round_up(int(tile_b), _LANE))
    b_pad = _round_up(B, _LANE)
    if b_pad <= tile_cap:
        if b_pad >= 2 * _LANE:
            tile = _round_up((b_pad + 1) // 2, _LANE)       # 2 grid steps
        else:
            tile = b_pad                                    # single small tile
    else:
        tile = tile_cap
    b_pad = _round_up(b_pad, tile)
    if b_pad != B:
        xT = jnp.pad(xT, ((0, 0), (0, b_pad - B)))          # zero cols, sliced off

    grid = (b_pad // tile,)

    # Weights/biases: full-array blocks with constant index_maps -> fetched
    # once, VMEM-resident across all batch tiles.
    def resident(a):
        return pl.BlockSpec(a.shape, lambda i: (0,) * a.ndim)

    out = pl.pallas_call(
        functools.partial(_mlp_kernel, n_action),
        out_shape=jax.ShapeDtypeStruct((n_action, b_pad), jnp.float32),
        grid=grid,
        in_specs=[
            pl.BlockSpec((k_pad, tile), lambda i: (0, i)),   # streamed input
            resident(w1), resident(b1),
            resident(w2), resident(b2),
            resident(w3), resident(b3),
        ],
        # Lane-dense output: last dim is the batch tile (>= 128 lanes).
        out_specs=pl.BlockSpec((n_action, tile), lambda i: (0, i)),
        compiler_params=pltpu.CompilerParams(
            dimension_semantics=("parallel",),   # batch tiles are independent
        ),
    )(xT, w1, b1, w2, b2, w3, b3)

    return out[:, :B].T                                     # (B, n_action)


def init_params(key, n_state, n_action):
    """PyTorch nn.Linear-style init (U[-1/sqrt(fan_in), +]), (out, in) weights."""
    ks = jax.random.split(key, 6)

    def linear(kw, kb, fan_in, fan_out):
        bound = 1.0 / jnp.sqrt(jnp.float32(fan_in))
        w = jax.random.uniform(kw, (fan_out, fan_in), jnp.float32, -bound, bound)
        b = jax.random.uniform(kb, (fan_out,), jnp.float32, -bound, bound)
        return w, b

    w1, b1 = linear(ks[0], ks[1], n_state, 256)
    w2, b2 = linear(ks[2], ks[3], 256, 256)
    w3, b3 = linear(ks[4], ks[5], 256, n_action)
    return dict(w1=w1, b1=b1, w2=w2, b2=b2, w3=w3, b3=b3)


def _reference(x, p):
    h = jnp.maximum(x @ p["w1"].T + p["b1"], 0.0)
    h = jnp.maximum(h @ p["w2"].T + p["b2"], 0.0)
    logits = h @ p["w3"].T + p["b3"]
    return jax.nn.softmax(logits, axis=1)


if __name__ == "__main__":
    n_state, n_action = 4, 2

    key = jax.random.PRNGKey(0)
    kp, kx1, kx2 = jax.random.split(key, 3)
    params = init_params(kp, n_state, n_action)

    # --- small batch, exact f32 weights (strict check) ---
    state_small = jax.random.normal(kx1, (8, n_state), jnp.float32)
    out_small = jax.block_until_ready(
        cartpole_net(state_small, params, param_dtype=None))
    exp_small = _reference(state_small, params)
    assert out_small.shape == (8, n_action)
    assert jnp.allclose(out_small, exp_small, atol=1e-5), "small-batch mismatch"
    assert jnp.allclose(jnp.sum(out_small, axis=1), 1.0, atol=1e-5)

    # --- larger, non-aligned batch: exercises multi-step grid + padding ---
    state_big = jax.random.normal(kx2, (300, n_state), jnp.float32)
    out_big = jax.block_until_ready(
        cartpole_net(state_big, params, param_dtype=None))
    exp_big = _reference(state_big, params)
    assert out_big.shape == (300, n_action)
    assert jnp.allclose(out_big, exp_big, atol=1e-5), "big-batch mismatch"
    assert jnp.allclose(jnp.sum(out_big, axis=1), 1.0, atol=1e-5)

    # --- default path: bf16 weights (recommended on v6e/v7x); loose tolerance ---
    out_bf16 = jax.block_until_ready(cartpole_net(state_big, params))
    assert out_bf16.shape == (300, n_action)
    assert jnp.allclose(out_bf16, exp_big, atol=5e-2), "bf16 path mismatch"
    assert jnp.allclose(jnp.sum(out_bf16, axis=1), 1.0, atol=1e-3)

    print("KERNEL_OK")
</pallas_src>

<mosaic_0001>
module attributes {stable_mosaic.version = 11 : i64} {
  func.func @_mlp_kernel(%arg0: i32, %arg1: memref<8x128xf32, #tpu.memory_space<vmem>>, %arg2: memref<256x8xf32, #tpu.memory_space<vmem>>, %arg3: memref<256x1xf32, #tpu.memory_space<vmem>>, %arg4: memref<256x256xf32, #tpu.memory_space<vmem>>, %arg5: memref<256x1xf32, #tpu.memory_space<vmem>>, %arg6: memref<2x256xf32, #tpu.memory_space<vmem>>, %arg7: memref<2x1xf32, #tpu.memory_space<vmem>>, %arg8: memref<2x128xf32, #tpu.memory_space<vmem>>) attributes {dimension_semantics = [#tpu.dimension_semantics<parallel>], iteration_bounds = array<i64: 1>, scalar_prefetch = 0 : i64, scratch_operands = 0 : i64, tpu.core_type = #tpu.core_type<tc>, window_params = [{transform_indices = @transform_0, window_bounds = array<i64: 8, 128>}, {pipeline_mode = #tpu.pipeline_mode<synchronous>, transform_indices = @transform_1, window_bounds = array<i64: 256, 8>}, {pipeline_mode = #tpu.pipeline_mode<synchronous>, transform_indices = @transform_2, window_bounds = array<i64: 256, 1>}, {pipeline_mode = #tpu.pipeline_mode<synchronous>, transform_indices = @transform_3, window_bounds = array<i64: 256, 256>}, {pipeline_mode = #tpu.pipeline_mode<synchronous>, transform_indices = @transform_4, window_bounds = array<i64: 256, 1>}, {pipeline_mode = #tpu.pipeline_mode<synchronous>, transform_indices = @transform_5, window_bounds = array<i64: 2, 256>}, {pipeline_mode = #tpu.pipeline_mode<synchronous>, transform_indices = @transform_6, window_bounds = array<i64: 2, 1>}, {transform_indices = @transform_7, window_bounds = array<i64: 2, 128>}]} {
    %c0 = arith.constant 0 : index
    %c0_0 = arith.constant 0 : index
    %0 = vector.load %arg1[%c0, %c0_0] : memref<8x128xf32, #tpu.memory_space<vmem>>, vector<8x128xf32>
    %c0_1 = arith.constant 0 : index
    %c0_2 = arith.constant 0 : index
    %1 = vector.load %arg2[%c0_1, %c0_2] : memref<256x8xf32, #tpu.memory_space<vmem>>, vector<256x8xf32>
    %cst = arith.constant dense<0.000000e+00> : vector<256x128xf32>
    %2 = tpu.matmul %1, %0, %cst {dimension_numbers = #tpu.dot_dimension_numbers<[1], [0], [0], [1], [0, 0, 1, 1], [], []>} : vector<256x8xf32>, vector<8x128xf32>, vector<256x128xf32> -> vector<256x128xf32>
    %c0_3 = arith.constant 0 : index
    %c0_4 = arith.constant 0 : index
    %3 = vector.load %arg3[%c0_3, %c0_4] : memref<256x1xf32, #tpu.memory_space<vmem>>, vector<256x1xf32>
    %4 = vector.broadcast %3 : vector<256x1xf32> to vector<256x128xf32>
    %5 = arith.addf %2, %4 : vector<256x128xf32>
    %cst_5 = arith.constant 0.000000e+00 : f32
    %6 = vector.broadcast %cst_5 : f32 to vector<256x128xf32>
    %7 = arith.maximumf %5, %6 : vector<256x128xf32>
    %c0_6 = arith.constant 0 : index
    %c0_7 = arith.constant 0 : index
    %8 = vector.load %arg4[%c0_6, %c0_7] : memref<256x256xf32, #tpu.memory_space<vmem>>, vector<256x256xf32>
    %cst_8 = arith.constant dense<0.000000e+00> : vector<256x128xf32>
    %9 = tpu.matmul %8, %7, %cst_8 {dimension_numbers = #tpu.dot_dimension_numbers<[1], [0], [0], [1], [0, 0, 1, 1], [], []>} : vector<256x256xf32>, vector<256x128xf32>, vector<256x128xf32> -> vector<256x128xf32>
    %c0_9 = arith.constant 0 : index
    %c0_10 = arith.constant 0 : index
    %10 = vector.load %arg5[%c0_9, %c0_10] : memref<256x1xf32, #tpu.memory_space<vmem>>, vector<256x1xf32>
    %11 = vector.broadcast %10 : vector<256x1xf32> to vector<256x128xf32>
    %12 = arith.addf %9, %11 : vector<256x128xf32>
    %cst_11 = arith.constant 0.000000e+00 : f32
    %13 = vector.broadcast %cst_11 : f32 to vector<256x128xf32>
    %14 = arith.maximumf %12, %13 : vector<256x128xf32>
    %c0_12 = arith.constant 0 : index
    %c0_13 = arith.constant 0 : index
    %15 = vector.load %arg6[%c0_12, %c0_13] : memref<2x256xf32, #tpu.memory_space<vmem>>, vector<2x256xf32>
    %cst_14 = arith.constant dense<0.000000e+00> : vector<2x128xf32>
    %16 = tpu.matmul %15, %14, %cst_14 {dimension_numbers = #tpu.dot_dimension_numbers<[1], [0], [0], [1], [0, 0, 1, 1], [], []>} : vector<2x256xf32>, vector<256x128xf32>, vector<2x128xf32> -> vector<2x128xf32>
    %c0_15 = arith.constant 0 : index
    %c0_16 = arith.constant 0 : index
    %17 = vector.load %arg7[%c0_15, %c0_16] : memref<2x1xf32, #tpu.memory_space<vmem>>, vector<2x1xf32>
    %18 = vector.broadcast %17 : vector<2x1xf32> to vector<2x128xf32>
    %19 = arith.addf %16, %18 : vector<2x128xf32>
    %20 = vector.extract_strided_slice %19 {offsets = [0, 0], sizes = [1, 128], strides = [1, 1]} : vector<2x128xf32> to vector<1x128xf32>
    %21 = vector.extract_strided_slice %19 {offsets = [1, 0], sizes = [1, 128], strides = [1, 1]} : vector<2x128xf32> to vector<1x128xf32>
    %22 = arith.subf %20, %21 : vector<1x128xf32>
    %cst_17 = arith.constant 0.000000e+00 : f32
    %23 = vector.broadcast %cst_17 : f32 to vector<1x128xf32>
    %24 = arith.subf %23, %22 : vector<1x128xf32>
    %25 = math.exp %24 : vector<1x128xf32>
    %cst_18 = arith.constant 1.000000e+00 : f32
    %26 = vector.broadcast %cst_18 : f32 to vector<1x128xf32>
    %27 = arith.addf %26, %25 : vector<1x128xf32>
    %cst_19 = arith.constant 1.000000e+00 : f32
    %28 = vector.broadcast %cst_19 : f32 to vector<1x128xf32>
    %29 = arith.divf %28, %27 : vector<1x128xf32>
    %c0_20 = arith.constant 0 : index
    %c0_21 = arith.constant 0 : index
    %30 = vector.load %arg8[%c0_20, %c0_21] : memref<2x128xf32, #tpu.memory_space<vmem>>, vector<1x128xf32>
    tpu.vector_store %arg8[%c0_20, %c0_21], %29 {strides = array<i32>} : memref<2x128xf32, #tpu.memory_space<vmem>>, vector<1x128xf32>,
    %cst_22 = arith.constant 1.000000e+00 : f32
    %31 = vector.broadcast %cst_22 : f32 to vector<1x128xf32>
    %32 = arith.subf %31, %29 : vector<1x128xf32>
    %c1 = arith.constant 1 : index
    %c0_23 = arith.constant 0 : index
    %33 = vector.load %arg8[%c1, %c0_23] : memref<2x128xf32, #tpu.memory_space<vmem>>, vector<1x128xf32>
    tpu.vector_store %arg8[%c1, %c0_23], %32 {strides = array<i32>} : memref<2x128xf32, #tpu.memory_space<vmem>>, vector<1x128xf32>,
    return
  }
  func.func @transform_0(%arg0: i32) -> (i32, i32) {
    %c0_i32 = arith.constant 0 : i32
    %c0_i32_0 = arith.constant 0 : i32
    return %c0_i32, %arg0 : i32, i32
  }
  func.func @transform_1(%arg0: i32) -> (i32, i32) {
    %c0_i32 = arith.constant 0 : i32
    %c0_i32_0 = arith.constant 0 : i32
    %c0_i32_1 = arith.constant 0 : i32
    return %c0_i32, %c0_i32_0 : i32, i32
  }
  func.func @transform_2(%arg0: i32) -> (i32, i32) {
    %c0_i32 = arith.constant 0 : i32
    %c0_i32_0 = arith.constant 0 : i32
    %c0_i32_1 = arith.constant 0 : i32
    return %c0_i32, %c0_i32_0 : i32, i32
  }
  func.func @transform_3(%arg0: i32) -> (i32, i32) {
    %c0_i32 = arith.constant 0 : i32
    %c0_i32_0 = arith.constant 0 : i32
    %c0_i32_1 = arith.constant 0 : i32
    return %c0_i32, %c0_i32_0 : i32, i32
  }
  func.func @transform_4(%arg0: i32) -> (i32, i32) {
    %c0_i32 = arith.constant 0 : i32
    %c0_i32_0 = arith.constant 0 : i32
    %c0_i32_1 = arith.constant 0 : i32
    return %c0_i32, %c0_i32_0 : i32, i32
  }
  func.func @transform_5(%arg0: i32) -> (i32, i32) {
    %c0_i32 = arith.constant 0 : i32
    %c0_i32_0 = arith.constant 0 : i32
    %c0_i32_1 = arith.constant 0 : i32
    return %c0_i32, %c0_i32_0 : i32, i32
  }
  func.func @transform_6(%arg0: i32) -> (i32, i32) {
    %c0_i32 = arith.constant 0 : i32
    %c0_i32_0 = arith.constant 0 : i32
    %c0_i32_1 = arith.constant 0 : i32
    return %c0_i32, %c0_i32_0 : i32, i32
  }
  func.func @transform_7(%arg0: i32) -> (i32, i32) {
    %c0_i32 = arith.constant 0 : i32
    %c0_i32_0 = arith.constant 0 : i32
    return %c0_i32, %arg0 : i32, i32
  }
}

</mosaic_0001>

<llo_original>
// kernel: tpu_custom_call.1
$region0: #{tpu_custom_call.1}
  #allocation0 [shape = 'u32[]', space=smem, size = 0x4, offset = 0x4, fixed_abs, tag = 'smem constant byte address 0x4 - core index']
  #allocation1 [shape = 'u32[144,128]{1,0:T(1,128)}', space=vmem, size = 0x12000, scoped, tag = 'internal scratch']
  %s0 = inlined_call_operand.vmem [shape: f32[8,128], index: 0, kind: input, shape index: {}]
  %s1 = inlined_call_operand.vmem [shape: f32[256,8], index: 1, kind: input, shape index: {}]
  %s2 = inlined_call_operand.vmem [shape: f32[256,1], index: 2, kind: input, shape index: {}]
  %s3 = inlined_call_operand.vmem [shape: f32[256,256], index: 3, kind: input, shape index: {}]
  %s4 = inlined_call_operand.vmem [shape: f32[256,1], index: 4, kind: input, shape index: {}]
  %s5 = inlined_call_operand.vmem [shape: f32[2,256], index: 5, kind: input, shape index: {}]
  %s6 = inlined_call_operand.vmem [shape: f32[2,1], index: 6, kind: input, shape index: {}]
  %s7 = inlined_call_operand.hbm [shape: f32[2,128], index: 7, kind: output, shape index: {}]
  %s8 = sld [smem:[#allocation0]]
  $region38: #{tpu_custom_call.1} parent=0
    _
  %s10 = ssub.s32 1, %s8
  %s11 = scalar_select 0, %s10, %s8
  $region1: #{tpu_custom_call.1} parent=0
    #allocation2 [shape = 'u8[1024]{0}', space=vmem, size = 0x400, scoped, tag = 'output window, operand 0, single buffered']
    #allocation3 [shape = 's32[1]{0}', space=sflag, size = 0x4, scoped, tag = 'scoped memory for tpu_custom_call.1']
    %12 = vsyncpa [#allocation3], 0
    // Predicated region
    $region2: #{tpu_custom_call.1} parent=1 // pred_check
      _
    $region3: #{tpu_custom_call.1} parent=1 // pred_check_branch
      %14 = sbr.rel (0) target = $region5
    $region4: #{tpu_custom_call.1} parent=1 // pred_region
      _
    $region5: #{tpu_custom_call.1} parent=1 // pred_fallthru
      _
    // Predicated region
    $region6: #{tpu_custom_call.1} parent=1 // pred_check
      _
    $region7: #{tpu_custom_call.1} parent=1 // pred_check_branch
      %16 = sbr.rel (0) target = $region9
    $region8: #{tpu_custom_call.1} parent=1 // pred_region
      _
    $region9: #{tpu_custom_call.1} parent=1 // pred_fallthru
      _
    // Predicated region
    $region10: #{tpu_custom_call.1} parent=1 // pred_check
      _
    $region11: #{tpu_custom_call.1} parent=1 // pred_check_branch
      %18 = sbr.rel (0) target = $region13
    $region12: #{tpu_custom_call.1} parent=1 // pred_region
      _
    $region13: #{tpu_custom_call.1} parent=1 // pred_fallthru
      _
    // Predicated region
    $region14: #{tpu_custom_call.1} parent=1 // pred_check
      _
    $region15: #{tpu_custom_call.1} parent=1 // pred_check_branch
      %20 = sbr.rel (0) target = $region17
    $region16: #{tpu_custom_call.1} parent=1 // pred_region
      _
    $region17: #{tpu_custom_call.1} parent=1 // pred_fallthru
      _
    // Predicated region
    $region18: #{tpu_custom_call.1} parent=1 // pred_check
      _
    $region19: #{tpu_custom_call.1} parent=1 // pred_check_branch
      %22 = sbr.rel (0) target = $region21
    $region20: #{tpu_custom_call.1} parent=1 // pred_region
      _
    $region21: #{tpu_custom_call.1} parent=1 // pred_fallthru
      _
    // Predicated region
    $region22: #{tpu_custom_call.1} parent=1 // pred_check
      _
    $region23: #{tpu_custom_call.1} parent=1 // pred_check_branch
      %24 = sbr.rel (0) target = $region25
    $region24: #{tpu_custom_call.1} parent=1 // pred_region
      _
    $region25: #{tpu_custom_call.1} parent=1 // pred_fallthru
      _
    // Predicated region
    $region26: #{tpu_custom_call.1} parent=1 // pred_check
      _
    $region27: #{tpu_custom_call.1} parent=1 // pred_check_branch
      %26 = sbr.rel (0) target = $region29
    $region28: #{tpu_custom_call.1} parent=1 // pred_region
      _
    $region29: #{tpu_custom_call.1} parent=1 // pred_fallthru
      _
    %v27 = vld [vmem:[%s0] sm:$0xff]
    %v28 = vld [vmem:[%s1] sm:$0xff]
    %v29 = vld [vmem:[%s1 + $0x8] sm:$0xff]
    %v30 = vld [vmem:[%s1 + $0x10] sm:$0xff]
    %v31 = vld [vmem:[%s1 + $0x18] sm:$0xff]
    %v32 = vld [vmem:[%s1 + $0x20] sm:$0xff]
    %v33 = vld [vmem:[%s1 + $0x28] sm:$0xff]
    %v34 = vld [vmem:[%s1 + $0x30] sm:$0xff]
    %v35 = vld [vmem:[%s1 + $0x38] sm:$0xff]
    %v36 = vld [vmem:[%s1 + $0x40] sm:$0xff]
    %v37 = vld [vmem:[%s1 + $0x48] sm:$0xff]
    %v38 = vld [vmem:[%s1 + $0x50] sm:$0xff]
    %v39 = vld [vmem:[%s1 + $0x58] sm:$0xff]
    %v40 = vld [vmem:[%s1 + $0x60] sm:$0xff]
    %v41 = vld [vmem:[%s1 + $0x68] sm:$0xff]
    %v42 = vld [vmem:[%s1 + $0x70] sm:$0xff]
    %v43 = vld [vmem:[%s1 + $0x78] sm:$0xff]
    %v44 = vld [vmem:[%s1 + $0x80] sm:$0xff]
    %v45 = vld [vmem:[%s1 + $0x88] sm:$0xff]
    %v46 = vld [vmem:[%s1 + $0x90] sm:$0xff]
    %v47 = vld [vmem:[%s1 + $0x98] sm:$0xff]
    %v48 = vld [vmem:[%s1 + $0xa0] sm:$0xff]
    %v49 = vld [vmem:[%s1 + $0xa8] sm:$0xff]
    %v50 = vld [vmem:[%s1 + $0xb0] sm:$0xff]
    %v51 = vld [vmem:[%s1 + $0xb8] sm:$0xff]
    %v52 = vld [vmem:[%s1 + $0xc0] sm:$0xff]
    %v53 = vld [vmem:[%s1 + $0xc8] sm:$0xff]
    %v54 = vld [vmem:[%s1 + $0xd0] sm:$0xff]
    %v55 = vld [vmem:[%s1 + $0xd8] sm:$0xff]
    %v56 = vld [vmem:[%s1 + $0xe0] sm:$0xff]
    %v57 = vld [vmem:[%s1 + $0xe8] sm:$0xff]
    %v58 = vld [vmem:[%s1 + $0xf0] sm:$0xff]
    %v59 = vld [vmem:[%s1 + $0xf8] sm:$0xff]
    %v60 = vld [vmem:[%s2] sm:$0xff]
    %v61 = vld [vmem:[%s2 + $0x8] sm:$0xff]
    %v62 = vld [vmem:[%s2 + $0x10] sm:$0xff]
    %v63 = vld [vmem:[%s2 + $0x18] sm:$0xff]
    %v64 = vld [vmem:[%s2 + $0x20] sm:$0xff]
    %v65 = vld [vmem:[%s2 + $0x28] sm:$0xff]
    %v66 = vld [vmem:[%s2 + $0x30] sm:$0xff]
    %v67 = vld [vmem:[%s2 + $0x38] sm:$0xff]
    %v68 = vld [vmem:[%s2 + $0x40] sm:$0xff]
    %v69 = vld [vmem:[%s2 + $0x48] sm:$0xff]
    %v70 = vld [vmem:[%s2 + $0x50] sm:$0xff]
    %v71 = vld [vmem:[%s2 + $0x58] sm:$0xff]
    %v72 = vld [vmem:[%s2 + $0x60] sm:$0xff]
    %v73 = vld [vmem:[%s2 + $0x68] sm:$0xff]
    %v74 = vld [vmem:[%s2 + $0x70] sm:$0xff]
    %v75 = vld [vmem:[%s2 + $0x78] sm:$0xff]
    %v76 = vld [vmem:[%s2 + $0x80] sm:$0xff]
    %v77 = vld [vmem:[%s2 + $0x88] sm:$0xff]
    %v78 = vld [vmem:[%s2 + $0x90] sm:$0xff]
    %v79 = vld [vmem:[%s2 + $0x98] sm:$0xff]
    %v80 = vld [vmem:[%s2 + $0xa0] sm:$0xff]
    %v81 = vld [vmem:[%s2 + $0xa8] sm:$0xff]
    %v82 = vld [vmem:[%s2 + $0xb0] sm:$0xff]
    %v83 = vld [vmem:[%s2 + $0xb8] sm:$0xff]
    %v84 = vld [vmem:[%s2 + $0xc0] sm:$0xff]
    %v85 = vld [vmem:[%s2 + $0xc8] sm:$0xff]
    %v86 = vld [vmem:[%s2 + $0xd0] sm:$0xff]
    %v87 = vld [vmem:[%s2 + $0xd8] sm:$0xff]
    %v88 = vld [vmem:[%s2 + $0xe0] sm:$0xff]
    %v89 = vld [vmem:[%s2 + $0xe8] sm:$0xff]
    %v90 = vld [vmem:[%s2 + $0xf0] sm:$0xff]
    %v91 = vld [vmem:[%s2 + $0xf8] sm:$0xff]
    %93 = vset.pattern.permute.xlu0 0
    %94 = vperm.xlu0 %93, %v60
    %v95 = vpop.permute.xlu0 %94
    %98 = vset.pattern.permute.xlu0 0
    %99 = vperm.xlu0 %98, %v61
    %v100 = vpop.permute.xlu0 %99
    %103 = vset.pattern.permute.xlu0 0
    %104 = vperm.xlu0 %103, %v62
    %v105 = vpop.permute.xlu0 %104
    %108 = vset.pattern.permute.xlu0 0
    %109 = vperm.xlu0 %108, %v63
    %v110 = vpop.permute.xlu0 %109
    %113 = vset.pattern.permute.xlu0 0
    %114 = vperm.xlu0 %113, %v64
    %v115 = vpop.permute.xlu0 %114
    %118 = vset.pattern.permute.xlu0 0
    %119 = vperm.xlu0 %118, %v65
    %v120 = vpop.permute.xlu0 %119
    %123 = vset.pattern.permute.xlu0 0
    %124 = vperm.xlu0 %123, %v66
    %v125 = vpop.permute.xlu0 %124
    %128 = vset.pattern.permute.xlu0 0
    %129 = vperm.xlu0 %128, %v67
    %v130 = vpop.permute.xlu0 %129
    %133 = vset.pattern.permute.xlu0 0
    %134 = vperm.xlu0 %133, %v68
    %v135 = vpop.permute.xlu0 %134
    %138 = vset.pattern.permute.xlu0 0
    %139 = vperm.xlu0 %138, %v69
    %v140 = vpop.permute.xlu0 %139
    %143 = vset.pattern.permute.xlu0 0
    %144 = vperm.xlu0 %143, %v70
    %v145 = vpop.permute.xlu0 %144
    %148 = vset.pattern.permute.xlu0 0
    %149 = vperm.xlu0 %148, %v71
    %v150 = vpop.permute.xlu0 %149
    %153 = vset.pattern.permute.xlu0 0
    %154 = vperm.xlu0 %153, %v72
    %v155 = vpop.permute.xlu0 %154
    %158 = vset.pattern.permute.xlu0 0
    %159 = vperm.xlu0 %158, %v73
    %v160 = vpop.permute.xlu0 %159
    %163 = vset.pattern.permute.xlu0 0
    %164 = vperm.xlu0 %163, %v74
    %v165 = vpop.permute.xlu0 %164
    %168 = vset.pattern.permute.xlu0 0
    %169 = vperm.xlu0 %168, %v75
    %v170 = vpop.permute.xlu0 %169
    %173 = vset.pattern.permute.xlu0 0
    %174 = vperm.xlu0 %173, %v76
    %v175 = vpop.permute.xlu0 %174
    %178 = vset.pattern.permute.xlu0 0
    %179 = vperm.xlu0 %178, %v77
    %v180 = vpop.permute.xlu0 %179
    %183 = vset.pattern.permute.xlu0 0
    %184 = vperm.xlu0 %183, %v78
    %v185 = vpop.permute.xlu0 %184
    %188 = vset.pattern.permute.xlu0 0
    %189 = vperm.xlu0 %188, %v79
    %v190 = vpop.permute.xlu0 %189
    %193 = vset.pattern.permute.xlu0 0
    %194 = vperm.xlu0 %193, %v80
    %v195 = vpop.permute.xlu0 %194
    %198 = vset.pattern.permute.xlu0 0
    %199 = vperm.xlu0 %198, %v81
    %v200 = vpop.permute.xlu0 %199
    %203 = vset.pattern.permute.xlu0 0
    %204 = vperm.xlu0 %203, %v82
    %v205 = vpop.permute.xlu0 %204
    %208 = vset.pattern.permute.xlu0 0
    %209 = vperm.xlu0 %208, %v83
    %v210 = vpop.permute.xlu0 %209
    %213 = vset.pattern.permute.xlu0 0
    %214 = vperm.xlu0 %213, %v84
    %v215 = vpop.permute.xlu0 %214
    %218 = vset.pattern.permute.xlu0 0
    %219 = vperm.xlu0 %218, %v85
    %v220 = vpop.permute.xlu0 %219
    %223 = vset.pattern.permute.xlu0 0
    %224 = vperm.xlu0 %223, %v86
    %v225 = vpop.permute.xlu0 %224
    %228 = vset.pattern.permute.xlu0 0
    %229 = vperm.xlu0 %228, %v87
    %v230 = vpop.permute.xlu0 %229
    %233 = vset.pattern.permute.xlu0 0
    %234 = vperm.xlu0 %233, %v88
    %v235 = vpop.permute.xlu0 %234
    %238 = vset.pattern.permute.xlu0 0
    %239 = vperm.xlu0 %238, %v89
    %v240 = vpop.permute.xlu0 %239
    %243 = vset.pattern.permute.xlu0 0
    %244 = vperm.xlu0 %243, %v90
    %v245 = vpop.permute.xlu0 %244
    %248 = vset.pattern.permute.xlu0 0
    %249 = vperm.xlu0 %248, %v91
    %v250 = vpop.permute.xlu0 %249
    %vm252 = vcmask 64512
    %v254 = vsel %vm252, %v28, 0
    %v257 = vsel %vm252, %v29, 0
    %v260 = vsel %vm252, %v30, 0
    %v263 = vsel %vm252, %v31, 0
    %v266 = vsel %vm252, %v32, 0
    %v269 = vsel %vm252, %v33, 0
    %v272 = vsel %vm252, %v34, 0
    %v275 = vsel %vm252, %v35, 0
    %v278 = vsel %vm252, %v36, 0
    %v281 = vsel %vm252, %v37, 0
    %v284 = vsel %vm252, %v38, 0
    %v287 = vsel %vm252, %v39, 0
    %v290 = vsel %vm252, %v40, 0
    %v293 = vsel %vm252, %v41, 0
    %v296 = vsel %vm252, %v42, 0
    %v299 = vsel %vm252, %v43, 0
    %v302 = vsel %vm252, %v44, 0
    %v305 = vsel %vm252, %v45, 0
    %v308 = vsel %vm252, %v46, 0
    %v311 = vsel %vm252, %v47, 0
    %v314 = vsel %vm252, %v48, 0
    %v317 = vsel %vm252, %v49, 0
    %v320 = vsel %vm252, %v50, 0
    %v323 = vsel %vm252, %v51, 0
    %v326 = vsel %vm252, %v52, 0
    %v329 = vsel %vm252, %v53, 0
    %v332 = vsel %vm252, %v54, 0
    %v335 = vsel %vm252, %v55, 0
    %v338 = vsel %vm252, %v56, 0
    %v341 = vsel %vm252, %v57, 0
    %v344 = vsel %vm252, %v58, 0
    %v347 = vsel %vm252, %v59, 0
    %349 = vmatprep.subr.mxu0 0.0
    %350 = vmatpush1.msra.mxu0 0.0
    %351 = vmatprep.subr.mxu0 0.0
    %352 = vmatpush1.msra.mxu0 0.0
    %353 = vmatprep.subr.mxu0 0.0
    %354 = vmatpush1.msra.mxu0 0.0
    %355 = vmatprep.subr.mxu0 0.0
    %356 = vmatpush1.msra.mxu0 0.0
    %357 = vmatprep.subr.mxu0 0.0
    %358 = vmatpush1.msra.mxu0 0.0
    %359 = vmatprep.subr.mxu0 0.0
    %360 = vmatpush1.msra.mxu0 0.0
    %361 = vmatprep.subr.mxu0 0.0
    %362 = vmatpush1.msra.mxu0 0.0
    %363 = vmatprep.subr.mxu0 0.0
    %364 = vmatpush1.msra.mxu0 0.0
    %365 = vmatprep.subr.mxu0 0.0
    %366 = vmatpush1.msra.mxu0 0.0
    %367 = vmatprep.subr.mxu0 0.0
    %368 = vmatpush1.msra.mxu0 0.0
    %369 = vmatprep.subr.mxu0 0.0
    %370 = vmatpush1.msra.mxu0 0.0
    %371 = vmatprep.subr.mxu0 0.0
    %372 = vmatpush1.msra.mxu0 0.0
    %373 = vmatprep.subr.mxu0 0.0
    %374 = vmatpush1.msra.mxu0 0.0
    %375 = vmatprep.subr.mxu0 0.0
    %376 = vmatpush1.msra.mxu0 0.0
    %377 = vmatprep.subr.mxu0 0.0
    %378 = vmatpush1.msra.mxu0 0.0
    %379 = vmatprep.subr.mxu0 0.0
    %380 = vmatpush1.msra.mxu0 %v27
    %381 = vmatprep.subr.mxu0 0.0
    %382 = vmatpush2.msra.mxu0 0.0
    %383 = vmatprep.subr.mxu0 0.0
    %384 = vmatpush2.msra.mxu0 0.0
    %385 = vmatprep.subr.mxu0 0.0
    %386 = vmatpush2.msra.mxu0 0.0
    %387 = vmatprep.subr.mxu0 0.0
    %388 = vmatpush2.msra.mxu0 0.0
    %389 = vmatprep.subr.mxu0 0.0
    %390 = vmatpush2.msra.mxu0 0.0
    %391 = vmatprep.subr.mxu0 0.0
    %392 = vmatpush2.msra.mxu0 0.0
    %393 = vmatprep.subr.mxu0 0.0
    %394 = vmatpush2.msra.mxu0 0.0
    %395 = vmatprep.subr.mxu0 0.0
    %396 = vmatpush2.msra.mxu0 0.0
    %397 = vmatprep.subr.mxu0 0.0
    %398 = vmatpush2.msra.mxu0 0.0
    %399 = vmatprep.subr.mxu0 0.0
    %400 = vmatpush2.msra.mxu0 0.0
    %401 = vmatprep.subr.mxu0 0.0
    %402 = vmatpush2.msra.mxu0 0.0
    %403 = vmatprep.subr.mxu0 0.0
    %404 = vmatpush2.msra.mxu0 0.0
    %405 = vmatprep.subr.mxu0 0.0
    %406 = vmatpush2.msra.mxu0 0.0
    %407 = vmatprep.subr.mxu0 0.0
    %408 = vmatpush2.msra.mxu0 0.0
    %409 = vmatprep.subr.mxu0 0.0
    %410 = vmatpush2.msra.mxu0 0.0
    %411 = vmatprep.subr.mxu0 0.0
    %412 = vmatpush2.msra.mxu0 0.0
    %413 = vmatprep.mubr.f32.mxu0 0.0
    %414 = vmatmul.mubr.f32.gmra.mxu0 %v254
    %v415 = vpop.f32.mrf.mxu0
    %v416 = vadd.f32 %v95, %v415
    %v417 = vpop.f32.mrf.mxu0
    %418 = vmatprep.mubr.f32.mxu0 0.0
    %419 = vmatmul.mubr.f32.gmra.mxu0 %v257
    %v420 = vpop.f32.mrf.mxu0
    %v421 = vadd.f32 %v100, %v420
    %v422 = vpop.f32.mrf.mxu0
    %423 = vmatprep.mubr.f32.mxu0 0.0
    %424 = vmatmul.mubr.f32.gmra.mxu0 %v260
    %v425 = vpop.f32.mrf.mxu0
    %v426 = vadd.f32 %v105, %v425
    %v427 = vpop.f32.mrf.mxu0
    %428 = vmatprep.mubr.f32.mxu0 0.0
    %429 = vmatmul.mubr.f32.gmra.mxu0 %v263
    %v430 = vpop.f32.mrf.mxu0
    %v431 = vadd.f32 %v110, %v430
    %v432 = vpop.f32.mrf.mxu0
    %433 = vmatprep.mubr.f32.mxu0 0.0
    %434 = vmatmul.mubr.f32.gmra.mxu0 %v266
    %v435 = vpop.f32.mrf.mxu0
    %v436 = vadd.f32 %v115, %v435
    %v437 = vpop.f32.mrf.mxu0
    %438 = vmatprep.mubr.f32.mxu0 0.0
    %439 = vmatmul.mubr.f32.gmra.mxu0 %v269
    %v440 = vpop.f32.mrf.mxu0
    %v441 = vadd.f32 %v120, %v440
    %v442 = vpop.f32.mrf.mxu0
    %443 = vmatprep.mubr.f32.mxu0 0.0
    %444 = vmatmul.mubr.f32.gmra.mxu0 %v272
    %v445 = vpop.f32.mrf.mxu0
    %v446 = vadd.f32 %v125, %v445
    %v447 = vpop.f32.mrf.mxu0
    %448 = vmatprep.mubr.f32.mxu0 0.0
    %449 = vmatmul.mubr.f32.gmra.mxu0 %v275
    %v450 = vpop.f32.mrf.mxu0
    %v451 = vadd.f32 %v130, %v450
    %v452 = vpop.f32.mrf.mxu0
    %453 = vmatprep.mubr.f32.mxu0 0.0
    %454 = vmatmul.mubr.f32.gmra.mxu0 %v278
    %v455 = vpop.f32.mrf.mxu0
    %v456 = vadd.f32 %v135, %v455
    %v457 = vpop.f32.mrf.mxu0
    %458 = vmatprep.mubr.f32.mxu0 0.0
    %459 = vmatmul.mubr.f32.gmra.mxu0 %v281
    %v460 = vpop.f32.mrf.mxu0
    %v461 = vadd.f32 %v140, %v460
    %v462 = vpop.f32.mrf.mxu0
    %463 = vmatprep.mubr.f32.mxu0 0.0
    %464 = vmatmul.mubr.f32.gmra.mxu0 %v284
    %v465 = vpop.f32.mrf.mxu0
    %v466 = vadd.f32 %v145, %v465
    %v467 = vpop.f32.mrf.mxu0
    %468 = vmatprep.mubr.f32.mxu0 0.0
    %469 = vmatmul.mubr.f32.gmra.mxu0 %v287
    %v470 = vpop.f32.mrf.mxu0
    %v471 = vadd.f32 %v150, %v470
    %v472 = vpop.f32.mrf.mxu0
    %473 = vmatprep.mubr.f32.mxu0 0.0
    %474 = vmatmul.mubr.f32.gmra.mxu0 %v290
    %v475 = vpop.f32.mrf.mxu0
    %v476 = vadd.f32 %v155, %v475
    %v477 = vpop.f32.mrf.mxu0
    %478 = vmatprep.mubr.f32.mxu0 0.0
    %479 = vmatmul.mubr.f32.gmra.mxu0 %v293
    %v480 = vpop.f32.mrf.mxu0
    %v481 = vadd.f32 %v160, %v480
    %v482 = vpop.f32.mrf.mxu0
    %483 = vmatprep.mubr.f32.mxu0 0.0
    %484 = vmatmul.mubr.f32.gmra.mxu0 %v296
    %v485 = vpop.f32.mrf.mxu0
    %v486 = vadd.f32 %v165, %v485
    %v487 = vpop.f32.mrf.mxu0
    %488 = vmatprep.mubr.f32.mxu0 0.0
    %489 = vmatmul.mubr.f32.gmra.mxu0 %v299
    %v490 = vpop.f32.mrf.mxu0
    %v491 = vadd.f32 %v170, %v490
    %v492 = vpop.f32.mrf.mxu0
    %493 = vmatprep.mubr.f32.mxu0 0.0
    %494 = vmatmul.mubr.f32.gmra.mxu0 %v302
    %v495 = vpop.f32.mrf.mxu0
    %v496 = vadd.f32 %v175, %v495
    %v497 = vpop.f32.mrf.mxu0
    %498 = vmatprep.mubr.f32.mxu0 0.0
    %499 = vmatmul.mubr.f32.gmra.mxu0 %v305
    %v500 = vpop.f32.mrf.mxu0
    %v501 = vadd.f32 %v180, %v500
    %v502 = vpop.f32.mrf.mxu0
    %503 = vmatprep.mubr.f32.mxu0 0.0
    %504 = vmatmul.mubr.f32.gmra.mxu0 %v308
    %v505 = vpop.f32.mrf.mxu0
    %v506 = vadd.f32 %v185, %v505
    %v507 = vpop.f32.mrf.mxu0
    %508 = vmatprep.mubr.f32.mxu0 0.0
    %509 = vmatmul.mubr.f32.gmra.mxu0 %v311
    %v510 = vpop.f32.mrf.mxu0
    %v511 = vadd.f32 %v190, %v510
    %v512 = vpop.f32.mrf.mxu0
    %513 = vmatprep.mubr.f32.mxu0 0.0
    %514 = vmatmul.mubr.f32.gmra.mxu0 %v314
    %v515 = vpop.f32.mrf.mxu0
    %v516 = vadd.f32 %v195, %v515
    %v517 = vpop.f32.mrf.mxu0
    %518 = vmatprep.mubr.f32.mxu0 0.0
    %519 = vmatmul.mubr.f32.gmra.mxu0 %v317
    %v520 = vpop.f32.mrf.mxu0
    %v521 = vadd.f32 %v200, %v520
    %v522 = vpop.f32.mrf.mxu0
    %523 = vmatprep.mubr.f32.mxu0 0.0
    %524 = vmatmul.mubr.f32.gmra.mxu0 %v320
    %v525 = vpop.f32.mrf.mxu0
    %v526 = vadd.f32 %v205, %v525
    %v527 = vpop.f32.mrf.mxu0
    %528 = vmatprep.mubr.f32.mxu0 0.0
    %529 = vmatmul.mubr.f32.gmra.mxu0 %v323
    %v530 = vpop.f32.mrf.mxu0
    %v531 = vadd.f32 %v210, %v530
    %v532 = vpop.f32.mrf.mxu0
    %533 = vmatprep.mubr.f32.mxu0 0.0
    %534 = vmatmul.mubr.f32.gmra.mxu0 %v326
    %v535 = vpop.f32.mrf.mxu0
    %v536 = vadd.f32 %v215, %v535
    %v537 = vpop.f32.mrf.mxu0
    %538 = vmatprep.mubr.f32.mxu0 0.0
    %539 = vmatmul.mubr.f32.gmra.mxu0 %v329
    %v540 = vpop.f32.mrf.mxu0
    %v541 = vadd.f32 %v220, %v540
    %v542 = vpop.f32.mrf.mxu0
    %543 = vmatprep.mubr.f32.mxu0 0.0
    %544 = vmatmul.mubr.f32.gmra.mxu0 %v332
    %v545 = vpop.f32.mrf.mxu0
    %v546 = vadd.f32 %v225, %v545
    %v547 = vpop.f32.mrf.mxu0
    %548 = vmatprep.mubr.f32.mxu0 0.0
    %549 = vmatmul.mubr.f32.gmra.mxu0 %v335
    %v550 = vpop.f32.mrf.mxu0
    %v551 = vadd.f32 %v230, %v550
    %v552 = vpop.f32.mrf.mxu0
    %553 = vmatprep.mubr.f32.mxu0 0.0
    %554 = vmatmul.mubr.f32.gmra.mxu0 %v338
    %v555 = vpop.f32.mrf.mxu0
    %v556 = vadd.f32 %v235, %v555
    %v557 = vpop.f32.mrf.mxu0
    %558 = vmatprep.mubr.f32.mxu0 0.0
    %559 = vmatmul.mubr.f32.gmra.mxu0 %v341
    %v560 = vpop.f32.mrf.mxu0
    %v561 = vadd.f32 %v240, %v560
    %v562 = vpop.f32.mrf.mxu0
    %563 = vmatprep.mubr.f32.mxu0 0.0
    %564 = vmatmul.mubr.f32.gmra.mxu0 %v344
    %v565 = vpop.f32.mrf.mxu0
    %v566 = vadd.f32 %v245, %v565
    %v567 = vpop.f32.mrf.mxu0
    %568 = vmatprep.mubr.f32.mxu0 0.0
    %569 = vmatmul.mubr.f32.gmra.mxu0 %v347
    %v570 = vpop.f32.mrf.mxu0
    %v571 = vadd.f32 %v250, %v570
    %v572 = vpop.f32.mrf.mxu0
    %573 = vdwg.mxu0
    %v574 = vmax.f32 %v416, 0.0
    %v575 = vmax.f32 %v421, 0.0
    %v576 = vmax.f32 %v426, 0.0
    %v577 = vmax.f32 %v431, 0.0
    %v578 = vmax.f32 %v436, 0.0
    %v579 = vmax.f32 %v441, 0.0
    %v580 = vmax.f32 %v446, 0.0
    %v581 = vmax.f32 %v451, 0.0
    %v582 = vmax.f32 %v456, 0.0
    %v583 = vmax.f32 %v461, 0.0
    %v584 = vmax.f32 %v466, 0.0
    %v585 = vmax.f32 %v471, 0.0
    %v586 = vmax.f32 %v476, 0.0
    %v587 = vmax.f32 %v481, 0.0
    %v588 = vmax.f32 %v486, 0.0
    %v589 = vmax.f32 %v491, 0.0
    %v590 = vmax.f32 %v496, 0.0
    %v591 = vmax.f32 %v501, 0.0
    %v592 = vmax.f32 %v506, 0.0
    %v593 = vmax.f32 %v511, 0.0
    %v594 = vmax.f32 %v516, 0.0
    %v595 = vmax.f32 %v521, 0.0
    %v596 = vmax.f32 %v526, 0.0
    %v597 = vmax.f32 %v531, 0.0
    %v598 = vmax.f32 %v536, 0.0
    %v599 = vmax.f32 %v541, 0.0
    %v600 = vmax.f32 %v546, 0.0
    %v601 = vmax.f32 %v551, 0.0
    %v602 = vmax.f32 %v556, 0.0
    %v603 = vmax.f32 %v561, 0.0
    %v604 = vmax.f32 %v566, 0.0
    %v605 = vmax.f32 %v571, 0.0
    %v606 = vld [vmem:[%s3] sm:$0xff]
    %v607 = vld [vmem:[%s3 + $0x8] sm:$0xff]
    %v608 = vld [vmem:[%s3 + $0x10] sm:$0xff]
    %v609 = vld [vmem:[%s3 + $0x18] sm:$0xff]
    %v610 = vld [vmem:[%s3 + $0x20] sm:$0xff]
    %v611 = vld [vmem:[%s3 + $0x28] sm:$0xff]
    %v612 = vld [vmem:[%s3 + $0x30] sm:$0xff]
    %v613 = vld [vmem:[%s3 + $0x38] sm:$0xff]
    %v614 = vld [vmem:[%s3 + $0x40] sm:$0xff]
    %v615 = vld [vmem:[%s3 + $0x48] sm:$0xff]
    %v616 = vld [vmem:[%s3 + $0x50] sm:$0xff]
    %v617 = vld [vmem:[%s3 + $0x58] sm:$0xff]
    %v618 = vld [vmem:[%s3 + $0x60] sm:$0xff]
    %v619 = vld [vmem:[%s3 + $0x68] sm:$0xff]
    %v620 = vld [vmem:[%s3 + $0x70] sm:$0xff]
    %v621 = vld [vmem:[%s3 + $0x78] sm:$0xff]
    %v622 = vld [vmem:[%s3 + $0x80] sm:$0xff]
    %v623 = vld [vmem:[%s3 + $0x88] sm:$0xff]
    %v624 = vld [vmem:[%s3 + $0x90] sm:$0xff]
    %v625 = vld [vmem:[%s3 + $0x98] sm:$0xff]
    %v626 = vld [vmem:[%s3 + $0xa0] sm:$0xff]
    %v627 = vld [vmem:[%s3 + $0xa8] sm:$0xff]
    %v628 = vld [vmem:[%s3 + $0xb0] sm:$0xff]
    %v629 = vld [vmem:[%s3 + $0xb8] sm:$0xff]
    %v630 = vld [vmem:[%s3 + $0xc0] sm:$0xff]
    %v631 = vld [vmem:[%s3 + $0xc8] sm:$0xff]
    %v632 = vld [vmem:[%s3 + $0xd0] sm:$0xff]
    %v633 = vld [vmem:[%s3 + $0xd8] sm:$0xff]
    %v634 = vld [vmem:[%s3 + $0xe0] sm:$0xff]
    %v635 = vld [vmem:[%s3 + $0xe8] sm:$0xff]
    %v636 = vld [vmem:[%s3 + $0xf0] sm:$0xff]
    %v637 = vld [vmem:[%s3 + $0xf8] sm:$0xff]
    %v638 = vld [vmem:[%s3 + $0x100] sm:$0xff]
    %v639 = vld [vmem:[%s3 + $0x108] sm:$0xff]
    %v640 = vld [vmem:[%s3 + $0x110] sm:$0xff]
    %v641 = vld [vmem:[%s3 + $0x118] sm:$0xff]
    %v642 = vld [vmem:[%s3 + $0x120] sm:$0xff]
    %v643 = vld [vmem:[%s3 + $0x128] sm:$0xff]
    %v644 = vld [vmem:[%s3 + $0x130] sm:$0xff]
    %v645 = vld [vmem:[%s3 + $0x138] sm:$0xff]
    %v646 = vld [vmem:[%s3 + $0x140] sm:$0xff]
    %v647 = vld [vmem:[%s3 + $0x148] sm:$0xff]
    %v648 = vld [vmem:[%s3 + $0x150] sm:$0xff]
    %v649 = vld [vmem:[%s3 + $0x158] sm:$0xff]
    %v650 = vld [vmem:[%s3 + $0x160] sm:$0xff]
    %v651 = vld [vmem:[%s3 + $0x168] sm:$0xff]
    %v652 = vld [vmem:[%s3 + $0x170] sm:$0xff]
    %v653 = vld [vmem:[%s3 + $0x178] sm:$0xff]
    %v654 = vld [vmem:[%s3 + $0x180] sm:$0xff]
    %v655 = vld [vmem:[%s3 + $0x188] sm:$0xff]
    %v656 = vld [vmem:[%s3 + $0x190] sm:$0xff]
    %v657 = vld [vmem:[%s3 + $0x198] sm:$0xff]
    %v658 = vld [vmem:[%s3 + $0x1a0] sm:$0xff]
    %v659 = vld [vmem:[%s3 + $0x1a8] sm:$0xff]
    %v660 = vld [vmem:[%s3 + $0x1b0] sm:$0xff]
    %v661 = vld [vmem:[%s3 + $0x1b8] sm:$0xff]
    %v662 = vld [vmem:[%s3 + $0x1c0] sm:$0xff]
    %v663 = vld [vmem:[%s3 + $0x1c8] sm:$0xff]
    %v664 = vld [vmem:[%s3 + $0x1d0] sm:$0xff]
    %v665 = vld [vmem:[%s3 + $0x1d8] sm:$0xff]
    %v666 = vld [vmem:[%s3 + $0x1e0] sm:$0xff]
    %v667 = vld [vmem:[%s3 + $0x1e8] sm:$0xff]
    %v668 = vld [vmem:[%s3 + $0x1f0] sm:$0xff]
    %v669 = vld [vmem:[%s3 + $0x1f8] sm:$0xff]
    %v670 = vld [vmem:[%s4] sm:$0xff]
    %v671 = vld [vmem:[%s4 + $0x8] sm:$0xff]
    %v672 = vld [vmem:[%s4 + $0x10] sm:$0xff]
    %v673 = vld [vmem:[%s4 + $0x18] sm:$0xff]
    %v674 = vld [vmem:[%s4 + $0x20] sm:$0xff]
    %v675 = vld [vmem:[%s4 + $0x28] sm:$0xff]
    %v676 = vld [vmem:[%s4 + $0x30] sm:$0xff]
    %v677 = vld [vmem:[%s4 + $0x38] sm:$0xff]
    %v678 = vld [vmem:[%s4 + $0x40] sm:$0xff]
    %v679 = vld [vmem:[%s4 + $0x48] sm:$0xff]
    %v680 = vld [vmem:[%s4 + $0x50] sm:$0xff]
    %v681 = vld [vmem:[%s4 + $0x58] sm:$0xff]
    %v682 = vld [vmem:[%s4 + $0x60] sm:$0xff]
    %v683 = vld [vmem:[%s4 + $0x68] sm:$0xff]
    %v684 = vld [vmem:[%s4 + $0x70] sm:$0xff]
    %v685 = vld [vmem:[%s4 + $0x78] sm:$0xff]
    %v686 = vld [vmem:[%s4 + $0x80] sm:$0xff]
    %v687 = vld [vmem:[%s4 + $0x88] sm:$0xff]
    %v688 = vld [vmem:[%s4 + $0x90] sm:$0xff]
    %v689 = vld [vmem:[%s4 + $0x98] sm:$0xff]
    %v690 = vld [vmem:[%s4 + $0xa0] sm:$0xff]
    %v691 = vld [vmem:[%s4 + $0xa8] sm:$0xff]
    %v692 = vld [vmem:[%s4 + $0xb0] sm:$0xff]
    %v693 = vld [vmem:[%s4 + $0xb8] sm:$0xff]
    %v694 = vld [vmem:[%s4 + $0xc0] sm:$0xff]
    %v695 = vld [vmem:[%s4 + $0xc8] sm:$0xff]
    %v696 = vld [vmem:[%s4 + $0xd0] sm:$0xff]
    %v697 = vld [vmem:[%s4 + $0xd8] sm:$0xff]
    %v698 = vld [vmem:[%s4 + $0xe0] sm:$0xff]
    %v699 = vld [vmem:[%s4 + $0xe8] sm:$0xff]
    %v700 = vld [vmem:[%s4 + $0xf0] sm:$0xff]
    %v701 = vld [vmem:[%s4 + $0xf8] sm:$0xff]
    %703 = vset.pattern.permute.xlu0 0
    %704 = vperm.xlu0 %703, %v670
    %v705 = vpop.permute.xlu0 %704
    %708 = vset.pattern.permute.xlu0 0
    %709 = vperm.xlu0 %708, %v671
    %v710 = vpop.permute.xlu0 %709
    %713 = vset.pattern.permute.xlu0 0
    %714 = vperm.xlu0 %713, %v672
    %v715 = vpop.permute.xlu0 %714
    %718 = vset.pattern.permute.xlu0 0
    %719 = vperm.xlu0 %718, %v673
    %v720 = vpop.permute.xlu0 %719
    %723 = vset.pattern.permute.xlu0 0
    %724 = vperm.xlu0 %723, %v674
    %v725 = vpop.permute.xlu0 %724
    %728 = vset.pattern.permute.xlu0 0
    %729 = vperm.xlu0 %728, %v675
    %v730 = vpop.permute.xlu0 %729
    %733 = vset.pattern.permute.xlu0 0
    %734 = vperm.xlu0 %733, %v676
    %v735 = vpop.permute.xlu0 %734
    %738 = vset.pattern.permute.xlu0 0
    %739 = vperm.xlu0 %738, %v677
    %v740 = vpop.permute.xlu0 %739
    %743 = vset.pattern.permute.xlu0 0
    %744 = vperm.xlu0 %743, %v678
    %v745 = vpop.permute.xlu0 %744
    %748 = vset.pattern.permute.xlu0 0
    %749 = vperm.xlu0 %748, %v679
    %v750 = vpop.permute.xlu0 %749
    %753 = vset.pattern.permute.xlu0 0
    %754 = vperm.xlu0 %753, %v680
    %v755 = vpop.permute.xlu0 %754
    %758 = vset.pattern.permute.xlu0 0
    %759 = vperm.xlu0 %758, %v681
    %v760 = vpop.permute.xlu0 %759
    %763 = vset.pattern.permute.xlu0 0
    %764 = vperm.xlu0 %763, %v682
    %v765 = vpop.permute.xlu0 %764
    %768 = vset.pattern.permute.xlu0 0
    %769 = vperm.xlu0 %768, %v683
    %v770 = vpop.permute.xlu0 %769
    %773 = vset.pattern.permute.xlu0 0
    %774 = vperm.xlu0 %773, %v684
    %v775 = vpop.permute.xlu0 %774
    %778 = vset.pattern.permute.xlu0 0
    %779 = vperm.xlu0 %778, %v685
    %v780 = vpop.permute.xlu0 %779
    %783 = vset.pattern.permute.xlu0 0
    %784 = vperm.xlu0 %783, %v686
    %v785 = vpop.permute.xlu0 %784
    %788 = vset.pattern.permute.xlu0 0
    %789 = vperm.xlu0 %788, %v687
    %v790 = vpop.permute.xlu0 %789
    %793 = vset.pattern.permute.xlu0 0
    %794 = vperm.xlu0 %793, %v688
    %v795 = vpop.permute.xlu0 %794
    %798 = vset.pattern.permute.xlu0 0
    %799 = vperm.xlu0 %798, %v689
    %v800 = vpop.permute.xlu0 %799
    %803 = vset.pattern.permute.xlu0 0
    %804 = vperm.xlu0 %803, %v690
    %v805 = vpop.permute.xlu0 %804
    %808 = vset.pattern.permute.xlu0 0
    %809 = vperm.xlu0 %808, %v691
    %v810 = vpop.permute.xlu0 %809
    %813 = vset.pattern.permute.xlu0 0
    %814 = vperm.xlu0 %813, %v692
    %v815 = vpop.permute.xlu0 %814
    %818 = vset.pattern.permute.xlu0 0
    %819 = vperm.xlu0 %818, %v693
    %v820 = vpop.permute.xlu0 %819
    %823 = vset.pattern.permute.xlu0 0
    %824 = vperm.xlu0 %823, %v694
    %v825 = vpop.permute.xlu0 %824
    %828 = vset.pattern.permute.xlu0 0
    %829 = vperm.xlu0 %828, %v695
    %v830 = vpop.permute.xlu0 %829
    %833 = vset.pattern.permute.xlu0 0
    %834 = vperm.xlu0 %833, %v696
    %v835 = vpop.permute.xlu0 %834
    %838 = vset.pattern.permute.xlu0 0
    %839 = vperm.xlu0 %838, %v697
    %v840 = vpop.permute.xlu0 %839
    %843 = vset.pattern.permute.xlu0 0
    %844 = vperm.xlu0 %843, %v698
    %v845 = vpop.permute.xlu0 %844
    %848 = vset.pattern.permute.xlu0 0
    %849 = vperm.xlu0 %848, %v699
    %v850 = vpop.permute.xlu0 %849
    %853 = vset.pattern.permute.xlu0 0
    %854 = vperm.xlu0 %853, %v700
    %v855 = vpop.permute.xlu0 %854
    %858 = vset.pattern.permute.xlu0 0
    %859 = vperm.xlu0 %858, %v701
    %v860 = vpop.permute.xlu0 %859
    %862 = vmatprep.subr.mxu0 0.0
    %863 = vmatpush1.msra.mxu0 %v589
    %864 = vmatprep.subr.mxu0 0.0
    %865 = vmatpush1.msra.mxu0 %v588
    %866 = vmatprep.subr.mxu0 0.0
    %867 = vmatpush1.msra.mxu0 %v587
    %868 = vmatprep.subr.mxu0 0.0
    %869 = vmatpush1.msra.mxu0 %v586
    %870 = vmatprep.subr.mxu0 0.0
    %871 = vmatpush1.msra.mxu0 %v585
    %872 = vmatprep.subr.mxu0 0.0
    %873 = vmatpush1.msra.mxu0 %v584
    %874 = vmatprep.subr.mxu0 0.0
    %875 = vmatpush1.msra.mxu0 %v583
    %876 = vmatprep.subr.mxu0 0.0
    %877 = vmatpush1.msra.mxu0 %v582
    %878 = vmatprep.subr.mxu0 0.0
    %879 = vmatpush1.msra.mxu0 %v581
    %880 = vmatprep.subr.mxu0 0.0
    %881 = vmatpush1.msra.mxu0 %v580
    %882 = vmatprep.subr.mxu0 0.0
    %883 = vmatpush1.msra.mxu0 %v579
    %884 = vmatprep.subr.mxu0 0.0
    %885 = vmatpush1.msra.mxu0 %v578
    %886 = vmatprep.subr.mxu0 0.0
    %887 = vmatpush1.msra.mxu0 %v577
    %888 = vmatprep.subr.mxu0 0.0
    %889 = vmatpush1.msra.mxu0 %v576
    %890 = vmatprep.subr.mxu0 0.0
    %891 = vmatpush1.msra.mxu0 %v575
    %892 = vmatprep.subr.mxu0 0.0
    %893 = vmatpush1.msra.mxu0 %v574
    %894 = vmatprep.subr.mxu0 0.0
    %895 = vmatpush2.msra.mxu0 %v605
    %896 = vmatprep.subr.mxu0 0.0
    %897 = vmatpush2.msra.mxu0 %v604
    %898 = vmatprep.subr.mxu0 0.0
    %899 = vmatpush2.msra.mxu0 %v603
    %900 = vmatprep.subr.mxu0 0.0
    %901 = vmatpush2.msra.mxu0 %v602
    %902 = vmatprep.subr.mxu0 0.0
    %903 = vmatpush2.msra.mxu0 %v601
    %904 = vmatprep.subr.mxu0 0.0
    %905 = vmatpush2.msra.mxu0 %v600
    %906 = vmatprep.subr.mxu0 0.0
    %907 = vmatpush2.msra.mxu0 %v599
    %908 = vmatprep.subr.mxu0 0.0
    %909 = vmatpush2.msra.mxu0 %v598
    %910 = vmatprep.subr.mxu0 0.0
    %911 = vmatpush2.msra.mxu0 %v597
    %912 = vmatprep.subr.mxu0 0.0
    %913 = vmatpush2.msra.mxu0 %v596
    %914 = vmatprep.subr.mxu0 0.0
    %915 = vmatpush2.msra.mxu0 %v595
    %916 = vmatprep.subr.mxu0 0.0
    %917 = vmatpush2.msra.mxu0 %v594
    %918 = vmatprep.subr.mxu0 0.0
    %919 = vmatpush2.msra.mxu0 %v593
    %920 = vmatprep.subr.mxu0 0.0
    %921 = vmatpush2.msra.mxu0 %v592
    %922 = vmatprep.subr.mxu0 0.0
    %923 = vmatpush2.msra.mxu0 %v591
    %924 = vmatprep.subr.mxu0 0.0
    %925 = vmatpush2.msra.mxu0 %v590
    %926 = vmatprep.mubr.f32.mxu0 %v607
    %927 = vmatmul.mubr.f32.gmra.mxu0 %v606
    %v928 = vpop.f32.mrf.mxu0
    %v929 = vadd.f32 %v705, %v928
    %v930 = vpop.f32.mrf.mxu0
    %931 = vmatprep.mubr.f32.mxu0 %v609
    %932 = vmatmul.mubr.f32.gmra.mxu0 %v608
    %v933 = vpop.f32.mrf.mxu0
    %v934 = vadd.f32 %v710, %v933
    %v935 = vpop.f32.mrf.mxu0
    %936 = vmatprep.mubr.f32.mxu0 %v611
    %937 = vmatmul.mubr.f32.gmra.mxu0 %v610
    %v938 = vpop.f32.mrf.mxu0
    %v939 = vadd.f32 %v715, %v938
    %v940 = vpop.f32.mrf.mxu0
    %941 = vmatprep.mubr.f32.mxu0 %v613
    %942 = vmatmul.mubr.f32.gmra.mxu0 %v612
    %v943 = vpop.f32.mrf.mxu0
    %v944 = vadd.f32 %v720, %v943
    %v945 = vpop.f32.mrf.mxu0
    %946 = vmatprep.mubr.f32.mxu0 %v615
    %947 = vmatmul.mubr.f32.gmra.mxu0 %v614
    %v948 = vpop.f32.mrf.mxu0
    %v949 = vadd.f32 %v725, %v948
    %v950 = vpop.f32.mrf.mxu0
    %951 = vmatprep.mubr.f32.mxu0 %v617
    %952 = vmatmul.mubr.f32.gmra.mxu0 %v616
    %v953 = vpop.f32.mrf.mxu0
    %v954 = vadd.f32 %v730, %v953
    %v955 = vpop.f32.mrf.mxu0
    %956 = vmatprep.mubr.f32.mxu0 %v619
    %957 = vmatmul.mubr.f32.gmra.mxu0 %v618
    %v958 = vpop.f32.mrf.mxu0
    %v959 = vadd.f32 %v735, %v958
    %v960 = vpop.f32.mrf.mxu0
    %961 = vmatprep.mubr.f32.mxu0 %v621
    %962 = vmatmul.mubr.f32.gmra.mxu0 %v620
    %v963 = vpop.f32.mrf.mxu0
    %v964 = vadd.f32 %v740, %v963
    %v965 = vpop.f32.mrf.mxu0
    %966 = vmatprep.mubr.f32.mxu0 %v623
    %967 = vmatmul.mubr.f32.gmra.mxu0 %v622
    %v968 = vpop.f32.mrf.mxu0
    %v969 = vadd.f32 %v745, %v968
    %v970 = vpop.f32.mrf.mxu0
    %971 = vmatprep.mubr.f32.mxu0 %v625
    %972 = vmatmul.mubr.f32.gmra.mxu0 %v624
    %v973 = vpop.f32.mrf.mxu0
    %v974 = vadd.f32 %v750, %v973
    %v975 = vpop.f32.mrf.mxu0
    %976 = vmatprep.mubr.f32.mxu0 %v627
    %977 = vmatmul.mubr.f32.gmra.mxu0 %v626
    %v978 = vpop.f32.mrf.mxu0
    %v979 = vadd.f32 %v755, %v978
    %v980 = vpop.f32.mrf.mxu0
    %981 = vmatprep.mubr.f32.mxu0 %v629
    %982 = vmatmul.mubr.f32.gmra.mxu0 %v628
    %v983 = vpop.f32.mrf.mxu0
    %v984 = vadd.f32 %v760, %v983
    %v985 = vpop.f32.mrf.mxu0
    %986 = vmatprep.mubr.f32.mxu0 %v631
    %987 = vmatmul.mubr.f32.gmra.mxu0 %v630
    %v988 = vpop.f32.mrf.mxu0
    %v989 = vadd.f32 %v765, %v988
    %v990 = vpop.f32.mrf.mxu0
    %991 = vmatprep.mubr.f32.mxu0 %v633
    %992 = vmatmul.mubr.f32.gmra.mxu0 %v632
    %v993 = vpop.f32.mrf.mxu0
    %v994 = vadd.f32 %v770, %v993
    %v995 = vpop.f32.mrf.mxu0
    %996 = vmatprep.mubr.f32.mxu0 %v635
    %997 = vmatmul.mubr.f32.gmra.mxu0 %v634
    %v998 = vpop.f32.mrf.mxu0
    %v999 = vadd.f32 %v775, %v998
    %v1000 = vpop.f32.mrf.mxu0
    %1001 = vmatprep.mubr.f32.mxu0 %v637
    %1002 = vmatmul.mubr.f32.gmra.mxu0 %v636
    %v1003 = vpop.f32.mrf.mxu0
    %v1004 = vadd.f32 %v780, %v1003
    %v1005 = vpop.f32.mrf.mxu0
    %1006 = vmatprep.mubr.f32.mxu0 %v639
    %1007 = vmatmul.mubr.f32.gmra.mxu0 %v638
    %v1008 = vpop.f32.mrf.mxu0
    %v1009 = vadd.f32 %v785, %v1008
    %v1010 = vpop.f32.mrf.mxu0
    %1011 = vmatprep.mubr.f32.mxu0 %v641
    %1012 = vmatmul.mubr.f32.gmra.mxu0 %v640
    %v1013 = vpop.f32.mrf.mxu0
    %v1014 = vadd.f32 %v790, %v1013
    %v1015 = vpop.f32.mrf.mxu0
    %1016 = vmatprep.mubr.f32.mxu0 %v643
    %1017 = vmatmul.mubr.f32.gmra.mxu0 %v642
    %v1018 = vpop.f32.mrf.mxu0
    %v1019 = vadd.f32 %v795, %v1018
    %v1020 = vpop.f32.mrf.mxu0
    %1021 = vmatprep.mubr.f32.mxu0 %v645
    %1022 = vmatmul.mubr.f32.gmra.mxu0 %v644
    %v1023 = vpop.f32.mrf.mxu0
    %v1024 = vadd.f32 %v800, %v1023
    %v1025 = vpop.f32.mrf.mxu0
    %1026 = vmatprep.mubr.f32.mxu0 %v647
    %1027 = vmatmul.mubr.f32.gmra.mxu0 %v646
    %v1028 = vpop.f32.mrf.mxu0
    %v1029 = vadd.f32 %v805, %v1028
    %v1030 = vpop.f32.mrf.mxu0
    %1031 = vmatprep.mubr.f32.mxu0 %v649
    %1032 = vmatmul.mubr.f32.gmra.mxu0 %v648
    %v1033 = vpop.f32.mrf.mxu0
    %v1034 = vadd.f32 %v810, %v1033
    %v1035 = vpop.f32.mrf.mxu0
    %1036 = vmatprep.mubr.f32.mxu0 %v651
    %1037 = vmatmul.mubr.f32.gmra.mxu0 %v650
    %v1038 = vpop.f32.mrf.mxu0
    %v1039 = vadd.f32 %v815, %v1038
    %v1040 = vpop.f32.mrf.mxu0
    %1041 = vmatprep.mubr.f32.mxu0 %v653
    %1042 = vmatmul.mubr.f32.gmra.mxu0 %v652
    %v1043 = vpop.f32.mrf.mxu0
    %v1044 = vadd.f32 %v820, %v1043
    %v1045 = vpop.f32.mrf.mxu0
    %1046 = vmatprep.mubr.f32.mxu0 %v655
    %1047 = vmatmul.mubr.f32.gmra.mxu0 %v654
    %v1048 = vpop.f32.mrf.mxu0
    %v1049 = vadd.f32 %v825, %v1048
    %v1050 = vpop.f32.mrf.mxu0
    %1051 = vmatprep.mubr.f32.mxu0 %v657
    %1052 = vmatmul.mubr.f32.gmra.mxu0 %v656
    %v1053 = vpop.f32.mrf.mxu0
    %v1054 = vadd.f32 %v830, %v1053
    %v1055 = vpop.f32.mrf.mxu0
    %1056 = vmatprep.mubr.f32.mxu0 %v659
    %1057 = vmatmul.mubr.f32.gmra.mxu0 %v658
    %v1058 = vpop.f32.mrf.mxu0
    %v1059 = vadd.f32 %v835, %v1058
    %v1060 = vpop.f32.mrf.mxu0
    %1061 = vmatprep.mubr.f32.mxu0 %v661
    %1062 = vmatmul.mubr.f32.gmra.mxu0 %v660
    %v1063 = vpop.f32.mrf.mxu0
    %v1064 = vadd.f32 %v840, %v1063
    %v1065 = vpop.f32.mrf.mxu0
    %1066 = vmatprep.mubr.f32.mxu0 %v663
    %1067 = vmatmul.mubr.f32.gmra.mxu0 %v662
    %v1068 = vpop.f32.mrf.mxu0
    %v1069 = vadd.f32 %v845, %v1068
    %v1070 = vpop.f32.mrf.mxu0
    %1071 = vmatprep.mubr.f32.mxu0 %v665
    %1072 = vmatmul.mubr.f32.gmra.mxu0 %v664
    %v1073 = vpop.f32.mrf.mxu0
    %v1074 = vadd.f32 %v850, %v1073
    %v1075 = vpop.f32.mrf.mxu0
    %1076 = vmatprep.mubr.f32.mxu0 %v667
    %1077 = vmatmul.mubr.f32.gmra.mxu0 %v666
    %v1078 = vpop.f32.mrf.mxu0
    %v1079 = vadd.f32 %v855, %v1078
    %v1080 = vpop.f32.mrf.mxu0
    %1081 = vmatprep.mubr.f32.mxu0 %v669
    %1082 = vmatmul.mubr.f32.gmra.mxu0 %v668
    %v1083 = vpop.f32.mrf.mxu0
    %v1084 = vadd.f32 %v860, %v1083
    %v1085 = vpop.f32.mrf.mxu0
    %1086 = vdwg.mxu0
    %v1087 = vmax.f32 %v929, 0.0
    %v1088 = vmax.f32 %v934, 0.0
    %v1089 = vmax.f32 %v939, 0.0
    %v1090 = vmax.f32 %v944, 0.0
    %v1091 = vmax.f32 %v949, 0.0
    %v1092 = vmax.f32 %v954, 0.0
    %v1093 = vmax.f32 %v959, 0.0
    %v1094 = vmax.f32 %v964, 0.0
    %v1095 = vmax.f32 %v969, 0.0
    %v1096 = vmax.f32 %v974, 0.0
    %v1097 = vmax.f32 %v979, 0.0
    %v1098 = vmax.f32 %v984, 0.0
    %v1099 = vmax.f32 %v989, 0.0
    %v1100 = vmax.f32 %v994, 0.0
    %v1101 = vmax.f32 %v999, 0.0
    %v1102 = vmax.f32 %v1004, 0.0
    %v1103 = vmax.f32 %v1009, 0.0
    %v1104 = vmax.f32 %v1014, 0.0
    %v1105 = vmax.f32 %v1019, 0.0
    %v1106 = vmax.f32 %v1024, 0.0
    %v1107 = vmax.f32 %v1029, 0.0
    %v1108 = vmax.f32 %v1034, 0.0
    %v1109 = vmax.f32 %v1039, 0.0
    %v1110 = vmax.f32 %v1044, 0.0
    %v1111 = vmax.f32 %v1049, 0.0
    %v1112 = vmax.f32 %v1054, 0.0
    %v1113 = vmax.f32 %v1059, 0.0
    %v1114 = vmax.f32 %v1064, 0.0
    %v1115 = vmax.f32 %v1069, 0.0
    %v1116 = vmax.f32 %v1074, 0.0
    %v1117 = vmax.f32 %v1079, 0.0
    %v1118 = vmax.f32 %v1084, 0.0
    %v1119 = vld [vmem:[%s5] sm:$0xf]
    %v1120 = vld [vmem:[%s6] sm:$0x3]
    %1122 = vset.pattern.permute.xlu0 0
    %1123 = vperm.xlu0 %1122, %v1120
    %v1124 = vpop.permute.xlu0 %1123
    %v1128 = vunpack.c.l.s4 1983009808
    %v1129 = vunpack.c.0.s8 %v1128
    %v1130 = vlaneseq
    %v1131 = vshrl.u32 %v1130, 7
    %v1132 = vsub.s32 %v1129, %v1131
    %v1133 = vrot.slane %v1119, %v1132
    %v1134 = vcombine.high %v1133, %v1133
    %1137 = vmatprep.subr.mxu0 0.0
    %1138 = vmatpush1.msra.mxu0 %v1102
    %1139 = vmatprep.subr.mxu0 0.0
    %1140 = vmatpush1.msra.mxu0 %v1101
    %1141 = vmatprep.subr.mxu0 0.0
    %1142 = vmatpush1.msra.mxu0 %v1100
    %1143 = vmatprep.subr.mxu0 0.0
    %1144 = vmatpush1.msra.mxu0 %v1099
    %1145 = vmatprep.subr.mxu0 0.0
    %1146 = vmatpush1.msra.mxu0 %v1098
    %1147 = vmatprep.subr.mxu0 0.0
    %1148 = vmatpush1.msra.mxu0 %v1097
    %1149 = vmatprep.subr.mxu0 0.0
    %1150 = vmatpush1.msra.mxu0 %v1096
    %1151 = vmatprep.subr.mxu0 0.0
    %1152 = vmatpush1.msra.mxu0 %v1095
    %1153 = vmatprep.subr.mxu0 0.0
    %1154 = vmatpush1.msra.mxu0 %v1094
    %1155 = vmatprep.subr.mxu0 0.0
    %1156 = vmatpush1.msra.mxu0 %v1093
    %1157 = vmatprep.subr.mxu0 0.0
    %1158 = vmatpush1.msra.mxu0 %v1092
    %1159 = vmatprep.subr.mxu0 0.0
    %1160 = vmatpush1.msra.mxu0 %v1091
    %1161 = vmatprep.subr.mxu0 0.0
    %1162 = vmatpush1.msra.mxu0 %v1090
    %1163 = vmatprep.subr.mxu0 0.0
    %1164 = vmatpush1.msra.mxu0 %v1089
    %1165 = vmatprep.subr.mxu0 0.0
    %1166 = vmatpush1.msra.mxu0 %v1088
    %1167 = vmatprep.subr.mxu0 0.0
    %1168 = vmatpush1.msra.mxu0 %v1087
    %1169 = vmatprep.subr.mxu0 0.0
    %1170 = vmatpush2.msra.mxu0 %v1118
    %1171 = vmatprep.subr.mxu0 0.0
    %1172 = vmatpush2.msra.mxu0 %v1117
    %1173 = vmatprep.subr.mxu0 0.0
    %1174 = vmatpush2.msra.mxu0 %v1116
    %1175 = vmatprep.subr.mxu0 0.0
    %1176 = vmatpush2.msra.mxu0 %v1115
    %1177 = vmatprep.subr.mxu0 0.0
    %1178 = vmatpush2.msra.mxu0 %v1114
    %1179 = vmatprep.subr.mxu0 0.0
    %1180 = vmatpush2.msra.mxu0 %v1113
    %1181 = vmatprep.subr.mxu0 0.0
    %1182 = vmatpush2.msra.mxu0 %v1112
    %1183 = vmatprep.subr.mxu0 0.0
    %1184 = vmatpush2.msra.mxu0 %v1111
    %1185 = vmatprep.subr.mxu0 0.0
    %1186 = vmatpush2.msra.mxu0 %v1110
    %1187 = vmatprep.subr.mxu0 0.0
    %1188 = vmatpush2.msra.mxu0 %v1109
    %1189 = vmatprep.subr.mxu0 0.0
    %1190 = vmatpush2.msra.mxu0 %v1108
    %1191 = vmatprep.subr.mxu0 0.0
    %1192 = vmatpush2.msra.mxu0 %v1107
    %1193 = vmatprep.subr.mxu0 0.0
    %1194 = vmatpush2.msra.mxu0 %v1106
    %1195 = vmatprep.subr.mxu0 0.0
    %1196 = vmatpush2.msra.mxu0 %v1105
    %1197 = vmatprep.subr.mxu0 0.0
    %1198 = vmatpush2.msra.mxu0 %v1104
    %1199 = vmatprep.subr.mxu0 0.0
    %1200 = vmatpush2.msra.mxu0 %v1103
    %1201 = vmatprep.mubr.f32.mxu0 %v1134
    %1202 = vmatmul.mubr.f32.gmra.mxu0 %v1133
    %v1203 = vpop.f32.mrf.mxu0
    %v1204 = vadd.f32 %v1124, %v1203
    %v1205 = vpop.f32.mrf.mxu0
    %1206 = vdwg.mxu0
    %v1208 = vrot.slane %v1204, 1
    %v1210 = vsub.f32 %v1204, %v1208
    %v1211 = vsub.f32 0.0, %v1210
    %v1212 = vmul.f32 %v1211, 1.442695
    %v1213 = vpow.pop %v1212
    %v1214 = vadd.f32 %v1213, 1.0
    %v1215 = vrcp.pop %v1214
    %v1216 = vmul.f32 1.0, %v1215
    %1217 = vst [vmem:[#allocation2] sm:$0x1] %v1216
    %v1218 = vsub.f32 1.0, %v1216
    %1219 = vst [vmem:[#allocation2 + $0x1] sm:$0x1] %v1218
    // Predicated region
    $region30: #{tpu_custom_call.1} parent=1 // pred_check
      _
    $region31: #{tpu_custom_call.1} parent=1 // pred_check_branch
      %1221 = sbr.rel (0) target = $region33
    $region32: #{tpu_custom_call.1} parent=1 // pred_region
      %s1223 = ssub.s32 32, 32
      %1224 = vsyncadd [#allocation3], %s1223
      %s1226 = sshll.u32 [#allocation2], 4
      %s1227 = int_to_ptr.vmem [resolvable:$true] %s1226
      %1229 = dma.vmem_to_hbm [thread:$0]  %s1227, 32, %s7, [#allocation3]
    $region33: #{tpu_custom_call.1} parent=1 // pred_fallthru
      _
    // Predicated region
    $region34: #{tpu_custom_call.1} parent=1 // pred_check
      _
    $region35: #{tpu_custom_call.1} parent=1 // pred_check_branch
      %1231 = sbr.rel (0) target = $region37
    $region36: #{tpu_custom_call.1} parent=1 // pred_region
      %1232 = dma.done [#allocation3], 32
    $region37: #{tpu_custom_call.1} parent=1 // pred_fallthru
      _
    %1233 = vsyncpa [#allocation3], 1

</llo_original>
